<compile_context>
chip_gen: v7x
topology: tpu7x:2x2x1
jax: 0.10.0
libtpu: 0.0.40
codegen_flags: <defaults>
</compile_context>

<pallas_src>
import functools

import jax
import jax.numpy as jnp
from jax.experimental import pallas as pl
from jax.experimental.pallas import tpu as pltpu

LAYER_SIZES = [8, 256, 512, 256, 128, 128, 4]          # fc1..fc6 (in -> out)
IN_DIMS = LAYER_SIZES[:-1]
OUT_DIMS = LAYER_SIZES[1:]

# --- Packed-weight layout -----------------------------------------------------------
# Three bf16 slabs grouped by (padded) input-row count, so almost no zero padding is
# DMA'd.  Per layer: (slab index, column offset within that slab, padded K, padded N).
W_SLAB_SHAPES = [(512, 256), (256, 640), (128, 512)]   # slab0 / slab1 / slab2
LAYER_LAYOUT = [
    # (slab, col_off, kin_padded, nout_padded)
    (2,   0,  16, 256),   # fc1:   8(->16) -> 256
    (1,   0, 256, 512),   # fc2: 256 -> 512
    (0,   0, 512, 256),   # fc3: 512 -> 256
    (1, 512, 256, 128),   # fc4: 256 -> 128
    (2, 256, 128, 128),   # fc5: 128 -> 128
    (2, 384, 128, 128),   # fc6: 128 -> 4 (-> 128 lane-dense output)
]
BIAS_OFFS = [0, 256, 768, 1024, 1152, 1280]
TOTAL_BIAS = 1408
X_PAD_FEATURES = 16                                     # fc1 K padded 8 -> 16 (bf16 tile)
OUT_PAD = 128                                           # lane-dense output width


def _round_up(x, m):
    return ((x + m - 1) // m) * m


def critic_kernel(x_ref, w512_ref, w256_ref, w128_ref, b_ref, o_ref):
    """One batch tile of the fused 6-layer MLP.

    x_ref:    (TB, 16)   bf16  -- input tile (features zero-padded 8 -> 16)
    w512_ref: (512, 256) bf16  -- fc3                              (VMEM-resident)
    w256_ref: (256, 640) bf16  -- fc2 | fc4, column-blocked        (VMEM-resident)
    w128_ref: (128, 512) bf16  -- fc1 | fc5 | fc6, column-blocked  (VMEM-resident)
    b_ref:    (1, 1408)  f32   -- all biases, column-blocked       (VMEM-resident)
    o_ref:    (TB, 128)  f32   -- lane-dense output (only first 4 columns meaningful)
    """
    w_slabs = (w512_ref, w256_ref, w128_ref)
    h = x_ref[...]                                       # (TB, 16) bf16
    n_layers = len(LAYER_LAYOUT)
    for li, (slab, off, kin, kout) in enumerate(LAYER_LAYOUT):
        w = w_slabs[slab][0:kin, off:off + kout]         # static slice of resident slab
        b = b_ref[0:1, BIAS_OFFS[li]:BIAS_OFFS[li] + kout]
        y = jnp.dot(h, w, preferred_element_type=jnp.float32) + b
        if li < n_layers - 1:
            h = jnp.maximum(y, 0.0).astype(jnp.bfloat16)
        else:
            o_ref[...] = y.astype(o_ref.dtype)           # full 128-lane unmasked store


@functools.partial(jax.jit, static_argnames=("block_b",))
def critic_forward(x, w512, w256, w128, bpack, block_b=1024):
    """x: (B, 8) f32. w*: bf16 slabs. bpack: (1, 1408) f32. Returns (B, 4) f32."""
    B = x.shape[0]

    # Batch tile: >= 8 (sublane), <= block_b (default 1024, multiple of 256 for MXU).
    tb = _round_up(min(block_b, max(B, 8)), 8)
    # v7x has 2 TensorCores: keep >= 2 grid steps when the batch allows so the
    # "parallel" batch axis can shard across both instead of idling one core.
    if B > 8 and _round_up(B, tb) // tb < 2:
        tb = _round_up((B + 1) // 2, 8)
    Bp = _round_up(B, tb)
    grid = (Bp // tb,)

    # Zero-pad batch B -> Bp and features 8 -> 16, cast to bf16 in the wrapper
    # (halves the per-tile input DMA; no in-kernel cast needed).
    xp = jnp.zeros((Bp, X_PAD_FEATURES), jnp.bfloat16)
    xp = xp.at[:B, :x.shape[1]].set(x.astype(jnp.bfloat16))

    w_bytes = sum(r * c * 2 for r, c in W_SLAB_SHAPES)
    flops = 2 * Bp * sum(kin * kout for (_, _, kin, kout) in LAYER_LAYOUT)
    bytes_accessed = (xp.size * 2 + w_bytes + TOTAL_BIAS * 4 + Bp * OUT_PAD * 4)

    out = pl.pallas_call(
        critic_kernel,
        out_shape=jax.ShapeDtypeStruct((Bp, OUT_PAD), jnp.float32),
        grid=grid,
        in_specs=[
            # Activations: tiled over the batch and pipelined.
            pl.BlockSpec((tb, X_PAD_FEATURES), lambda i: (i, 0)),
            # Weights / biases: constant index_map -> DMA'd once, VMEM-resident.
            pl.BlockSpec(W_SLAB_SHAPES[0], lambda i: (0, 0)),
            pl.BlockSpec(W_SLAB_SHAPES[1], lambda i: (0, 0)),
            pl.BlockSpec(W_SLAB_SHAPES[2], lambda i: (0, 0)),
            pl.BlockSpec((1, TOTAL_BIAS), lambda i: (0, 0)),
        ],
        out_specs=pl.BlockSpec((tb, OUT_PAD), lambda i: (i, 0)),
        compiler_params=pltpu.CompilerParams(
            dimension_semantics=("parallel",),
            # Explicit budget: ample for tb<=2048 I/O double-buffers + resident slabs
            # + spilled layer intermediates; safe on v5e/v6e/v7x.
            vmem_limit_bytes=32 * 1024 * 1024,
        ),
        cost_estimate=pl.CostEstimate(
            flops=flops, transcendentals=0, bytes_accessed=bytes_accessed),
    )(xp, w512, w256, w128, bpack)

    return out[:B, :OUT_DIMS[-1]]


def init_params(key):
    """PyTorch nn.Linear-style init (uniform +-1/sqrt(fan_in)). Weights stored (in, out)."""
    params = []
    for i in range(len(LAYER_SIZES) - 1):
        fan_in, fan_out = LAYER_SIZES[i], LAYER_SIZES[i + 1]
        key, kw, kb = jax.random.split(key, 3)
        bound = 1.0 / jnp.sqrt(jnp.float32(fan_in))
        w = jax.random.uniform(kw, (fan_in, fan_out), jnp.float32, -bound, bound)
        b = jax.random.uniform(kb, (fan_out,), jnp.float32, -bound, bound)
        params += [w, b]
    return params


def pack_params(params):
    """Pack [w1, b1, ..., w6, b6] into three bf16 weight slabs + one f32 bias slab."""
    slabs = [jnp.zeros(s, jnp.float32) for s in W_SLAB_SHAPES]
    bpack = jnp.zeros((1, TOTAL_BIAS), jnp.float32)
    for li in range(len(IN_DIMS)):
        w, b = params[2 * li], params[2 * li + 1]
        kin, kout = w.shape
        slab, off, _, _ = LAYER_LAYOUT[li]
        slabs[slab] = slabs[slab].at[:kin, off:off + kout].set(w)
        bpack = bpack.at[0, BIAS_OFFS[li]:BIAS_OFFS[li] + kout].set(b.reshape(-1))
    w512, w256, w128 = (s.astype(jnp.bfloat16) for s in slabs)
    return w512, w256, w128, bpack


def reference_forward(x, params):
    """Pure-JAX f32 reference for correctness check."""
    h = x
    n = len(params) // 2
    for li in range(n):
        h = h @ params[2 * li] + params[2 * li + 1]
        if li < n - 1:
            h = jnp.maximum(h, 0.0)
    return h


if __name__ == "__main__":
    key = jax.random.PRNGKey(0)
    key, kx = jax.random.split(key)
    batch = 8
    x = jax.random.normal(kx, (batch, LAYER_SIZES[0]), jnp.float32)

    params = init_params(key)
    w512, w256, w128, bpack = pack_params(params)

    out = critic_forward(x, w512, w256, w128, bpack)
    out = jax.block_until_ready(out)

    ref = reference_forward(x, params)
    assert out.shape == (batch, LAYER_SIZES[-1]), out.shape
    # bf16 weights/activations (f32 accumulation) -> loosened tolerance vs f32 reference.
    assert jnp.allclose(out, ref, atol=2e-2, rtol=2e-2), (
        f"mismatch vs reference: max abs err {jnp.max(jnp.abs(out - ref))}")

    print("KERNEL_OK")
</pallas_src>

<mosaic_0001>
module attributes {stable_mosaic.version = 11 : i64} {
  func.func @critic_kernel(%arg0: i32, %arg1: memref<8x16xbf16, #tpu.memory_space<vmem>>, %arg2: memref<512x256xbf16, #tpu.memory_space<vmem>>, %arg3: memref<256x640xbf16, #tpu.memory_space<vmem>>, %arg4: memref<128x512xbf16, #tpu.memory_space<vmem>>, %arg5: memref<1x1408xf32, #tpu.memory_space<vmem>>, %arg6: memref<8x128xf32, #tpu.memory_space<vmem>>) attributes {dimension_semantics = [#tpu.dimension_semantics<parallel>], iteration_bounds = array<i64: 1>, scalar_prefetch = 0 : i64, scratch_operands = 0 : i64, tpu.core_type = #tpu.core_type<tc>, window_params = [{transform_indices = @transform_0, window_bounds = array<i64: 8, 16>}, {pipeline_mode = #tpu.pipeline_mode<synchronous>, transform_indices = @transform_1, window_bounds = array<i64: 512, 256>}, {pipeline_mode = #tpu.pipeline_mode<synchronous>, transform_indices = @transform_2, window_bounds = array<i64: 256, 640>}, {pipeline_mode = #tpu.pipeline_mode<synchronous>, transform_indices = @transform_3, window_bounds = array<i64: 128, 512>}, {pipeline_mode = #tpu.pipeline_mode<synchronous>, transform_indices = @transform_4, window_bounds = array<i64: 1, 1408>}, {transform_indices = @transform_5, window_bounds = array<i64: 8, 128>}]} {
    %c0 = arith.constant 0 : index
    %c0_0 = arith.constant 0 : index
    %0 = vector.load %arg1[%c0, %c0_0] : memref<8x16xbf16, #tpu.memory_space<vmem>>, vector<8x16xbf16>
    %c0_1 = arith.constant 0 : index
    %c0_2 = arith.constant 0 : index
    %1 = vector.load %arg4[%c0_1, %c0_2] : memref<128x512xbf16, #tpu.memory_space<vmem>>, vector<16x256xbf16>
    %c0_3 = arith.constant 0 : index
    %c0_4 = arith.constant 0 : index
    %2 = vector.load %arg5[%c0_3, %c0_4] : memref<1x1408xf32, #tpu.memory_space<vmem>>, vector<1x256xf32>
    %cst = arith.constant dense<0.000000e+00> : vector<8x256xf32>
    %3 = tpu.matmul %0, %1, %cst {dimension_numbers = #tpu.dot_dimension_numbers<[1], [0], [0], [1], [0, 0, 1, 1], [], []>} : vector<8x16xbf16>, vector<16x256xbf16>, vector<8x256xf32> -> vector<8x256xf32>
    %4 = vector.broadcast %2 : vector<1x256xf32> to vector<8x256xf32>
    %5 = arith.addf %3, %4 : vector<8x256xf32>
    %cst_5 = arith.constant 0.000000e+00 : f32
    %6 = vector.broadcast %cst_5 : f32 to vector<8x256xf32>
    %7 = arith.maximumf %5, %6 : vector<8x256xf32>
    %8 = arith.truncf %7 : vector<8x256xf32> to vector<8x256xbf16>
    %c0_6 = arith.constant 0 : index
    %c0_7 = arith.constant 0 : index
    %9 = vector.load %arg3[%c0_6, %c0_7] : memref<256x640xbf16, #tpu.memory_space<vmem>>, vector<256x512xbf16>
    %c0_8 = arith.constant 0 : index
    %c256 = arith.constant 256 : index
    %10 = vector.load %arg5[%c0_8, %c256] : memref<1x1408xf32, #tpu.memory_space<vmem>>, vector<1x512xf32>
    %cst_9 = arith.constant dense<0.000000e+00> : vector<8x512xf32>
    %11 = tpu.matmul %8, %9, %cst_9 {dimension_numbers = #tpu.dot_dimension_numbers<[1], [0], [0], [1], [0, 0, 1, 1], [], []>} : vector<8x256xbf16>, vector<256x512xbf16>, vector<8x512xf32> -> vector<8x512xf32>
    %12 = vector.broadcast %10 : vector<1x512xf32> to vector<8x512xf32>
    %13 = arith.addf %11, %12 : vector<8x512xf32>
    %cst_10 = arith.constant 0.000000e+00 : f32
    %14 = vector.broadcast %cst_10 : f32 to vector<8x512xf32>
    %15 = arith.maximumf %13, %14 : vector<8x512xf32>
    %16 = arith.truncf %15 : vector<8x512xf32> to vector<8x512xbf16>
    %c0_11 = arith.constant 0 : index
    %c0_12 = arith.constant 0 : index
    %17 = vector.load %arg2[%c0_11, %c0_12] : memref<512x256xbf16, #tpu.memory_space<vmem>>, vector<512x256xbf16>
    %c0_13 = arith.constant 0 : index
    %c768 = arith.constant 768 : index
    %18 = vector.load %arg5[%c0_13, %c768] : memref<1x1408xf32, #tpu.memory_space<vmem>>, vector<1x256xf32>
    %cst_14 = arith.constant dense<0.000000e+00> : vector<8x256xf32>
    %19 = tpu.matmul %16, %17, %cst_14 {dimension_numbers = #tpu.dot_dimension_numbers<[1], [0], [0], [1], [0, 0, 1, 1], [], []>} : vector<8x512xbf16>, vector<512x256xbf16>, vector<8x256xf32> -> vector<8x256xf32>
    %20 = vector.broadcast %18 : vector<1x256xf32> to vector<8x256xf32>
    %21 = arith.addf %19, %20 : vector<8x256xf32>
    %cst_15 = arith.constant 0.000000e+00 : f32
    %22 = vector.broadcast %cst_15 : f32 to vector<8x256xf32>
    %23 = arith.maximumf %21, %22 : vector<8x256xf32>
    %24 = arith.truncf %23 : vector<8x256xf32> to vector<8x256xbf16>
    %c0_16 = arith.constant 0 : index
    %c512 = arith.constant 512 : index
    %25 = vector.load %arg3[%c0_16, %c512] : memref<256x640xbf16, #tpu.memory_space<vmem>>, vector<256x128xbf16>
    %c0_17 = arith.constant 0 : index
    %c1024 = arith.constant 1024 : index
    %26 = vector.load %arg5[%c0_17, %c1024] : memref<1x1408xf32, #tpu.memory_space<vmem>>, vector<1x128xf32>
    %cst_18 = arith.constant dense<0.000000e+00> : vector<8x128xf32>
    %27 = tpu.matmul %24, %25, %cst_18 {dimension_numbers = #tpu.dot_dimension_numbers<[1], [0], [0], [1], [0, 0, 1, 1], [], []>} : vector<8x256xbf16>, vector<256x128xbf16>, vector<8x128xf32> -> vector<8x128xf32>
    %28 = vector.broadcast %26 : vector<1x128xf32> to vector<8x128xf32>
    %29 = arith.addf %27, %28 : vector<8x128xf32>
    %cst_19 = arith.constant 0.000000e+00 : f32
    %30 = vector.broadcast %cst_19 : f32 to vector<8x128xf32>
    %31 = arith.maximumf %29, %30 : vector<8x128xf32>
    %32 = arith.truncf %31 : vector<8x128xf32> to vector<8x128xbf16>
    %c0_20 = arith.constant 0 : index
    %c256_21 = arith.constant 256 : index
    %33 = vector.load %arg4[%c0_20, %c256_21] : memref<128x512xbf16, #tpu.memory_space<vmem>>, vector<128x128xbf16>
    %c0_22 = arith.constant 0 : index
    %c1152 = arith.constant 1152 : index
    %34 = vector.load %arg5[%c0_22, %c1152] : memref<1x1408xf32, #tpu.memory_space<vmem>>, vector<1x128xf32>
    %cst_23 = arith.constant dense<0.000000e+00> : vector<8x128xf32>
    %35 = tpu.matmul %32, %33, %cst_23 {dimension_numbers = #tpu.dot_dimension_numbers<[1], [0], [0], [1], [0, 0, 1, 1], [], []>} : vector<8x128xbf16>, vector<128x128xbf16>, vector<8x128xf32> -> vector<8x128xf32>
    %36 = vector.broadcast %34 : vector<1x128xf32> to vector<8x128xf32>
    %37 = arith.addf %35, %36 : vector<8x128xf32>
    %cst_24 = arith.constant 0.000000e+00 : f32
    %38 = vector.broadcast %cst_24 : f32 to vector<8x128xf32>
    %39 = arith.maximumf %37, %38 : vector<8x128xf32>
    %40 = arith.truncf %39 : vector<8x128xf32> to vector<8x128xbf16>
    %c0_25 = arith.constant 0 : index
    %c384 = arith.constant 384 : index
    %41 = vector.load %arg4[%c0_25, %c384] : memref<128x512xbf16, #tpu.memory_space<vmem>>, vector<128x128xbf16>
    %c0_26 = arith.constant 0 : index
    %c1280 = arith.constant 1280 : index
    %42 = vector.load %arg5[%c0_26, %c1280] : memref<1x1408xf32, #tpu.memory_space<vmem>>, vector<1x128xf32>
    %cst_27 = arith.constant dense<0.000000e+00> : vector<8x128xf32>
    %43 = tpu.matmul %40, %41, %cst_27 {dimension_numbers = #tpu.dot_dimension_numbers<[1], [0], [0], [1], [0, 0, 1, 1], [], []>} : vector<8x128xbf16>, vector<128x128xbf16>, vector<8x128xf32> -> vector<8x128xf32>
    %44 = vector.broadcast %42 : vector<1x128xf32> to vector<8x128xf32>
    %45 = arith.addf %43, %44 : vector<8x128xf32>
    %c0_28 = arith.constant 0 : index
    %c0_29 = arith.constant 0 : index
    %46 = vector.load %arg6[%c0_28, %c0_29] : memref<8x128xf32, #tpu.memory_space<vmem>>, vector<8x128xf32>
    tpu.vector_store %arg6[%c0_28, %c0_29], %45 {strides = array<i32>} : memref<8x128xf32, #tpu.memory_space<vmem>>, vector<8x128xf32>,
    return
  }
  func.func @transform_0(%arg0: i32) -> (i32, i32) {
    %c0_i32 = arith.constant 0 : i32
    %c0_i32_0 = arith.constant 0 : i32
    return %arg0, %c0_i32 : i32, i32
  }
  func.func @transform_1(%arg0: i32) -> (i32, i32) {
    %c0_i32 = arith.constant 0 : i32
    %c0_i32_0 = arith.constant 0 : i32
    %c0_i32_1 = arith.constant 0 : i32
    return %c0_i32, %c0_i32_0 : i32, i32
  }
  func.func @transform_2(%arg0: i32) -> (i32, i32) {
    %c0_i32 = arith.constant 0 : i32
    %c0_i32_0 = arith.constant 0 : i32
    %c0_i32_1 = arith.constant 0 : i32
    return %c0_i32, %c0_i32_0 : i32, i32
  }
  func.func @transform_3(%arg0: i32) -> (i32, i32) {
    %c0_i32 = arith.constant 0 : i32
    %c0_i32_0 = arith.constant 0 : i32
    %c0_i32_1 = arith.constant 0 : i32
    return %c0_i32, %c0_i32_0 : i32, i32
  }
  func.func @transform_4(%arg0: i32) -> (i32, i32) {
    %c0_i32 = arith.constant 0 : i32
    %c0_i32_0 = arith.constant 0 : i32
    %c0_i32_1 = arith.constant 0 : i32
    return %c0_i32, %c0_i32_0 : i32, i32
  }
  func.func @transform_5(%arg0: i32) -> (i32, i32) {
    %c0_i32 = arith.constant 0 : i32
    %c0_i32_0 = arith.constant 0 : i32
    return %arg0, %c0_i32 : i32, i32
  }
}

</mosaic_0001>

<llo_original>
// kernel: critic_forward.1
$region0: #{critic_forward.1}
  #allocation0 [shape = 'u32[]', space=smem, size = 0x4, offset = 0x4, fixed_abs, tag = 'smem constant byte address 0x4 - core index']
  #allocation1 [shape = 'u32[144,128]{1,0:T(1,128)}', space=vmem, size = 0x12000, scoped, tag = 'internal scratch']
  %s0 = inlined_call_operand.vmem [shape: bf16[8,16], index: 0, kind: input, shape index: {}]
  %s1 = inlined_call_operand.hbm [shape: bf16[512,256], index: 1, kind: input, shape index: {}]
  %s2 = inlined_call_operand.hbm [shape: bf16[256,640], index: 2, kind: input, shape index: {}]
  %s3 = inlined_call_operand.hbm [shape: bf16[128,512], index: 3, kind: input, shape index: {}]
  %s4 = inlined_call_operand.vmem [shape: f32[1,1408], index: 4, kind: input, shape index: {}]
  %s5 = inlined_call_operand.vmem [shape: f32[8,128], index: 5, kind: output, shape index: {}]
  %s6 = sld [smem:[#allocation0]]
  $region42: #{critic_forward.1} parent=0
    _
  %s8 = ssub.s32 1, %s6
  %s9 = scalar_select 0, %s8, %s6
  $region1: #{critic_forward.1} parent=0
    #allocation2 [shape = 'u8[262144]{0}', space=vmem, size = 0x40000, scoped, tag = 'input window, operand 1, single buffered']
    #allocation3 [shape = 's32[1]{0}', space=sflag, size = 0x4, scoped, tag = 'scoped memory for critic_forward.1']
    #allocation4 [shape = 'u8[327680]{0}', space=vmem, size = 0x50000, scoped, tag = 'input window, operand 2, single buffered']
    #allocation5 [shape = 's32[1]{0}', space=sflag, size = 0x4, scoped, tag = 'scoped memory for critic_forward.1']
    #allocation6 [shape = 'u8[131072]{0}', space=vmem, size = 0x20000, scoped, tag = 'input window, operand 3, single buffered']
    %10 = vsyncpa [#allocation3], 0
    %11 = vsyncpa [#allocation5], 0
    // Predicated region
    $region2: #{critic_forward.1} parent=1 // pred_check
      _
    $region3: #{critic_forward.1} parent=1 // pred_check_branch
      %13 = sbr.rel (0) target = $region5
    $region4: #{critic_forward.1} parent=1 // pred_region
      _
    $region5: #{critic_forward.1} parent=1 // pred_fallthru
      _
    // Predicated region
    $region6: #{critic_forward.1} parent=1 // pred_check
      _
    $region7: #{critic_forward.1} parent=1 // pred_check_branch
      %15 = sbr.rel (0) target = $region9
    $region8: #{critic_forward.1} parent=1 // pred_region
      %s17 = ssub.s32 8192, 8192
      %18 = vsyncadd [#allocation3], %s17
      %s19 = sshll.u32 [#allocation2], 4
      %s20 = int_to_ptr.vmem [resolvable:$true] %s19
      %25 = dma.hbm_to_vmem [thread:$0]  %s1, 8192, %s20, [#allocation3], 128, 128, 8
    $region9: #{critic_forward.1} parent=1 // pred_fallthru
      _
    // Predicated region
    $region10: #{critic_forward.1} parent=1 // pred_check
      _
    $region11: #{critic_forward.1} parent=1 // pred_check_branch
      %27 = sbr.rel (0) target = $region13
    $region12: #{critic_forward.1} parent=1 // pred_region
      %s29 = ssub.s32 10240, 10240
      %30 = vsyncadd [#allocation5], %s29
      %s31 = sshll.u32 [#allocation4], 4
      %s32 = int_to_ptr.vmem [resolvable:$true] %s31
      %37 = dma.hbm_to_vmem [thread:$0]  %s2, 10240, %s32, [#allocation5], 320, 320, 20
    $region13: #{critic_forward.1} parent=1 // pred_fallthru
      _
    // Predicated region
    $region14: #{critic_forward.1} parent=1 // pred_check
      _
    $region15: #{critic_forward.1} parent=1 // pred_check_branch
      %39 = sbr.rel (0) target = $region17
    $region16: #{critic_forward.1} parent=1 // pred_region
      %s41 = ssub.s32 4096, 4096
      %42 = vsyncadd [#allocation5], %s41
      %s43 = sshll.u32 [#allocation6], 4
      %s44 = int_to_ptr.vmem [resolvable:$true] %s43
      %49 = dma.hbm_to_vmem [thread:$0]  %s3, 4096, %s44, [#allocation5], 256, 256, 16
    $region17: #{critic_forward.1} parent=1 // pred_fallthru
      _
    // Predicated region
    $region18: #{critic_forward.1} parent=1 // pred_check
      _
    $region19: #{critic_forward.1} parent=1 // pred_check_branch
      %51 = sbr.rel (0) target = $region21
    $region20: #{critic_forward.1} parent=1 // pred_region
      _
    $region21: #{critic_forward.1} parent=1 // pred_fallthru
      _
    // Predicated region
    $region22: #{critic_forward.1} parent=1 // pred_check
      _
    $region23: #{critic_forward.1} parent=1 // pred_check_branch
      %53 = sbr.rel (0) target = $region25
    $region24: #{critic_forward.1} parent=1 // pred_region
      %54 = dma.done [#allocation3], 8192
    $region25: #{critic_forward.1} parent=1 // pred_fallthru
      _
    // Predicated region
    $region26: #{critic_forward.1} parent=1 // pred_check
      _
    $region27: #{critic_forward.1} parent=1 // pred_check_branch
      %56 = sbr.rel (0) target = $region29
    $region28: #{critic_forward.1} parent=1 // pred_region
      %57 = dma.done [#allocation5], 10240
    $region29: #{critic_forward.1} parent=1 // pred_fallthru
      _
    // Predicated region
    $region30: #{critic_forward.1} parent=1 // pred_check
      _
    $region31: #{critic_forward.1} parent=1 // pred_check_branch
      %59 = sbr.rel (0) target = $region33
    $region32: #{critic_forward.1} parent=1 // pred_region
      %60 = dma.done [#allocation5], 4096
    $region33: #{critic_forward.1} parent=1 // pred_fallthru
      _
    %v62 = vld [vmem:[%s0] sm:$0xf]
    %v63 = vld [vmem:[#allocation6] sm:$0xff]
    %v64 = vld [vmem:[#allocation6 + $0x10] sm:$0xff]
    %v65 = vld [vmem:[%s4] sm:$0x3]
    %v67 = vlaneseq
    %v68 = vshrl.u32 %v67, 7
    %v69 = vsub.s32 0, %v68
    %v70 = vrot.slane %v65, %v69
    %v71 = vlaneseq
    %v72 = vshrl.u32 %v71, 7
    %v73 = vsub.s32 1, %v72
    %v74 = vrot.slane %v65, %v73
    %v79 = vunpack.c.l.b16 %v63
    %v80 = vunpack.c.h.b16 %v63
    %v81 = vunpack.c.l.b16 %v64
    %v82 = vunpack.c.h.b16 %v64
    %v83 = vpack.c.b16 %v81, %v79
    %v84 = vpack.c.b16 %v82, %v80
    %vm87 = vcmask 130048
    %v89 = vsel %vm87, %v62, 0
    %91 = vmatprep.subr.bf16.mxu0 %v84
    %92 = vmatpush1.bf16.msra.mxu0 %v83
    %93 = vmatprep.subr.bf16.mxu0 0
    %94 = vmatpush1.bf16.msra.mxu0 0
    %95 = vmatprep.subr.bf16.mxu0 0
    %96 = vmatpush1.bf16.msra.mxu0 0
    %97 = vmatprep.subr.bf16.mxu0 0
    %98 = vmatpush1.bf16.msra.mxu0 0
    %99 = vmatprep.subr.bf16.mxu0 0
    %100 = vmatpush1.bf16.msra.mxu0 0
    %101 = vmatprep.subr.bf16.mxu0 0
    %102 = vmatpush1.bf16.msra.mxu0 0
    %103 = vmatprep.subr.bf16.mxu0 0
    %104 = vmatpush1.bf16.msra.mxu0 0
    %105 = vmatprep.subr.bf16.mxu0 0
    %106 = vmatpush1.bf16.msra.mxu0 0
    %107 = vmatprep.subr.bf16.mxu0 0
    %108 = vmatpush1.bf16.msra.mxu0 0
    %109 = vmatprep.subr.bf16.mxu0 0
    %110 = vmatpush1.bf16.msra.mxu0 0
    %111 = vmatprep.subr.bf16.mxu0 0
    %112 = vmatpush1.bf16.msra.mxu0 0
    %113 = vmatprep.subr.bf16.mxu0 0
    %114 = vmatpush1.bf16.msra.mxu0 0
    %115 = vmatprep.subr.bf16.mxu0 0
    %116 = vmatpush1.bf16.msra.mxu0 0
    %117 = vmatprep.subr.bf16.mxu0 0
    %118 = vmatpush1.bf16.msra.mxu0 0
    %119 = vmatprep.subr.bf16.mxu0 0
    %120 = vmatpush1.bf16.msra.mxu0 0
    %121 = vmatprep.subr.bf16.mxu0 0
    %122 = vmatpush1.bf16.msra.mxu0 0
    %123 = vmatprep.mubr.bf16.mxu0 0
    %124 = vmatmul.mubr.bf16.gmra.mrb[0].mxu0 %v89
    %v125 = vpop.f32.mrb[0].mxu0
    %v126 = vadd.f32 %v70, %v125
    %v127 = vpop.f32.mrb[0].mxu0
    %v128 = vadd.f32 %v74, %v127
    %v129 = vpop.f32.mrb[0].mxu0
    %v130 = vpop.f32.mrb[0].mxu0
    %131 = vdwg.mxu0
    %v132 = vmax.f32 %v126, 0.0
    %v133 = vmax.f32 %v128, 0.0
    %v134 = vpack.c.bf16 %v132, %v132
    %v135 = vpack.c.bf16 %v133, %v133
    %v136 = vld [vmem:[#allocation4] sm:$0xff]
    %v137 = vld [vmem:[#allocation4 + $0x8] sm:$0xff]
    %v138 = vld [vmem:[#allocation4 + $0x14] sm:$0xff]
    %v139 = vld [vmem:[#allocation4 + $0x1c] sm:$0xff]
    %v140 = vld [vmem:[#allocation4 + $0x28] sm:$0xff]
    %v141 = vld [vmem:[#allocation4 + $0x30] sm:$0xff]
    %v142 = vld [vmem:[#allocation4 + $0x3c] sm:$0xff]
    %v143 = vld [vmem:[#allocation4 + $0x44] sm:$0xff]
    %v144 = vld [vmem:[#allocation4 + $0x50] sm:$0xff]
    %v145 = vld [vmem:[#allocation4 + $0x58] sm:$0xff]
    %v146 = vld [vmem:[#allocation4 + $0x64] sm:$0xff]
    %v147 = vld [vmem:[#allocation4 + $0x6c] sm:$0xff]
    %v148 = vld [vmem:[#allocation4 + $0x78] sm:$0xff]
    %v149 = vld [vmem:[#allocation4 + $0x80] sm:$0xff]
    %v150 = vld [vmem:[#allocation4 + $0x8c] sm:$0xff]
    %v151 = vld [vmem:[#allocation4 + $0x94] sm:$0xff]
    %v152 = vld [vmem:[#allocation4 + $0xa0] sm:$0xff]
    %v153 = vld [vmem:[#allocation4 + $0xa8] sm:$0xff]
    %v154 = vld [vmem:[#allocation4 + $0xb4] sm:$0xff]
    %v155 = vld [vmem:[#allocation4 + $0xbc] sm:$0xff]
    %v156 = vld [vmem:[#allocation4 + $0xc8] sm:$0xff]
    %v157 = vld [vmem:[#allocation4 + $0xd0] sm:$0xff]
    %v158 = vld [vmem:[#allocation4 + $0xdc] sm:$0xff]
    %v159 = vld [vmem:[#allocation4 + $0xe4] sm:$0xff]
    %v160 = vld [vmem:[#allocation4 + $0xf0] sm:$0xff]
    %v161 = vld [vmem:[#allocation4 + $0xf8] sm:$0xff]
    %v162 = vld [vmem:[#allocation4 + $0x104] sm:$0xff]
    %v163 = vld [vmem:[#allocation4 + $0x10c] sm:$0xff]
    %v164 = vld [vmem:[#allocation4 + $0x118] sm:$0xff]
    %v165 = vld [vmem:[#allocation4 + $0x120] sm:$0xff]
    %v166 = vld [vmem:[#allocation4 + $0x12c] sm:$0xff]
    %v167 = vld [vmem:[#allocation4 + $0x134] sm:$0xff]
    %v168 = vld [vmem:[#allocation4 + $0x140] sm:$0xff]
    %v169 = vld [vmem:[#allocation4 + $0x148] sm:$0xff]
    %v170 = vld [vmem:[#allocation4 + $0x154] sm:$0xff]
    %v171 = vld [vmem:[#allocation4 + $0x15c] sm:$0xff]
    %v172 = vld [vmem:[#allocation4 + $0x168] sm:$0xff]
    %v173 = vld [vmem:[#allocation4 + $0x170] sm:$0xff]
    %v174 = vld [vmem:[#allocation4 + $0x17c] sm:$0xff]
    %v175 = vld [vmem:[#allocation4 + $0x184] sm:$0xff]
    %v176 = vld [vmem:[#allocation4 + $0x190] sm:$0xff]
    %v177 = vld [vmem:[#allocation4 + $0x198] sm:$0xff]
    %v178 = vld [vmem:[#allocation4 + $0x1a4] sm:$0xff]
    %v179 = vld [vmem:[#allocation4 + $0x1ac] sm:$0xff]
    %v180 = vld [vmem:[#allocation4 + $0x1b8] sm:$0xff]
    %v181 = vld [vmem:[#allocation4 + $0x1c0] sm:$0xff]
    %v182 = vld [vmem:[#allocation4 + $0x1cc] sm:$0xff]
    %v183 = vld [vmem:[#allocation4 + $0x1d4] sm:$0xff]
    %v184 = vld [vmem:[#allocation4 + $0x1e0] sm:$0xff]
    %v185 = vld [vmem:[#allocation4 + $0x1e8] sm:$0xff]
    %v186 = vld [vmem:[#allocation4 + $0x1f4] sm:$0xff]
    %v187 = vld [vmem:[#allocation4 + $0x1fc] sm:$0xff]
    %v188 = vld [vmem:[#allocation4 + $0x208] sm:$0xff]
    %v189 = vld [vmem:[#allocation4 + $0x210] sm:$0xff]
    %v190 = vld [vmem:[#allocation4 + $0x21c] sm:$0xff]
    %v191 = vld [vmem:[#allocation4 + $0x224] sm:$0xff]
    %v192 = vld [vmem:[#allocation4 + $0x230] sm:$0xff]
    %v193 = vld [vmem:[#allocation4 + $0x238] sm:$0xff]
    %v194 = vld [vmem:[#allocation4 + $0x244] sm:$0xff]
    %v195 = vld [vmem:[#allocation4 + $0x24c] sm:$0xff]
    %v196 = vld [vmem:[#allocation4 + $0x258] sm:$0xff]
    %v197 = vld [vmem:[#allocation4 + $0x260] sm:$0xff]
    %v198 = vld [vmem:[#allocation4 + $0x26c] sm:$0xff]
    %v199 = vld [vmem:[#allocation4 + $0x274] sm:$0xff]
    %v200 = vld [vmem:[%s4 + $0x2] sm:$0xf]
    %v202 = vlaneseq
    %v203 = vshrl.u32 %v202, 7
    %v204 = vsub.s32 0, %v203
    %v205 = vrot.slane %v200, %v204
    %v206 = vlaneseq
    %v207 = vshrl.u32 %v206, 7
    %v208 = vsub.s32 1, %v207
    %v209 = vrot.slane %v200, %v208
    %v210 = vlaneseq
    %v211 = vshrl.u32 %v210, 7
    %v212 = vsub.s32 2, %v211
    %v213 = vrot.slane %v200, %v212
    %v214 = vlaneseq
    %v215 = vshrl.u32 %v214, 7
    %v216 = vsub.s32 3, %v215
    %v217 = vrot.slane %v200, %v216
    %v286 = vunpack.c.l.b16 %v136
    %v287 = vunpack.c.h.b16 %v136
    %v288 = vunpack.c.l.b16 %v137
    %v289 = vunpack.c.h.b16 %v137
    %v290 = vunpack.c.l.b16 %v138
    %v291 = vunpack.c.h.b16 %v138
    %v292 = vunpack.c.l.b16 %v139
    %v293 = vunpack.c.h.b16 %v139
    %v294 = vunpack.c.l.b16 %v140
    %v295 = vunpack.c.h.b16 %v140
    %v296 = vunpack.c.l.b16 %v141
    %v297 = vunpack.c.h.b16 %v141
    %v298 = vunpack.c.l.b16 %v142
    %v299 = vunpack.c.h.b16 %v142
    %v300 = vunpack.c.l.b16 %v143
    %v301 = vunpack.c.h.b16 %v143
    %v302 = vunpack.c.l.b16 %v144
    %v303 = vunpack.c.h.b16 %v144
    %v304 = vunpack.c.l.b16 %v145
    %v305 = vunpack.c.h.b16 %v145
    %v306 = vunpack.c.l.b16 %v146
    %v307 = vunpack.c.h.b16 %v146
    %v308 = vunpack.c.l.b16 %v147
    %v309 = vunpack.c.h.b16 %v147
    %v310 = vunpack.c.l.b16 %v148
    %v311 = vunpack.c.h.b16 %v148
    %v312 = vunpack.c.l.b16 %v149
    %v313 = vunpack.c.h.b16 %v149
    %v314 = vunpack.c.l.b16 %v150
    %v315 = vunpack.c.h.b16 %v150
    %v316 = vunpack.c.l.b16 %v151
    %v317 = vunpack.c.h.b16 %v151
    %v318 = vunpack.c.l.b16 %v152
    %v319 = vunpack.c.h.b16 %v152
    %v320 = vunpack.c.l.b16 %v153
    %v321 = vunpack.c.h.b16 %v153
    %v322 = vunpack.c.l.b16 %v154
    %v323 = vunpack.c.h.b16 %v154
    %v324 = vunpack.c.l.b16 %v155
    %v325 = vunpack.c.h.b16 %v155
    %v326 = vunpack.c.l.b16 %v156
    %v327 = vunpack.c.h.b16 %v156
    %v328 = vunpack.c.l.b16 %v157
    %v329 = vunpack.c.h.b16 %v157
    %v330 = vunpack.c.l.b16 %v158
    %v331 = vunpack.c.h.b16 %v158
    %v332 = vunpack.c.l.b16 %v159
    %v333 = vunpack.c.h.b16 %v159
    %v334 = vunpack.c.l.b16 %v160
    %v335 = vunpack.c.h.b16 %v160
    %v336 = vunpack.c.l.b16 %v161
    %v337 = vunpack.c.h.b16 %v161
    %v338 = vunpack.c.l.b16 %v162
    %v339 = vunpack.c.h.b16 %v162
    %v340 = vunpack.c.l.b16 %v163
    %v341 = vunpack.c.h.b16 %v163
    %v342 = vunpack.c.l.b16 %v164
    %v343 = vunpack.c.h.b16 %v164
    %v344 = vunpack.c.l.b16 %v165
    %v345 = vunpack.c.h.b16 %v165
    %v346 = vunpack.c.l.b16 %v166
    %v347 = vunpack.c.h.b16 %v166
    %v348 = vunpack.c.l.b16 %v167
    %v349 = vunpack.c.h.b16 %v167
    %v350 = vunpack.c.l.b16 %v168
    %v351 = vunpack.c.h.b16 %v168
    %v352 = vunpack.c.l.b16 %v169
    %v353 = vunpack.c.h.b16 %v169
    %v354 = vunpack.c.l.b16 %v170
    %v355 = vunpack.c.h.b16 %v170
    %v356 = vunpack.c.l.b16 %v171
    %v357 = vunpack.c.h.b16 %v171
    %v358 = vunpack.c.l.b16 %v172
    %v359 = vunpack.c.h.b16 %v172
    %v360 = vunpack.c.l.b16 %v173
    %v361 = vunpack.c.h.b16 %v173
    %v362 = vunpack.c.l.b16 %v174
    %v363 = vunpack.c.h.b16 %v174
    %v364 = vunpack.c.l.b16 %v175
    %v365 = vunpack.c.h.b16 %v175
    %v366 = vunpack.c.l.b16 %v176
    %v367 = vunpack.c.h.b16 %v176
    %v368 = vunpack.c.l.b16 %v177
    %v369 = vunpack.c.h.b16 %v177
    %v370 = vunpack.c.l.b16 %v178
    %v371 = vunpack.c.h.b16 %v178
    %v372 = vunpack.c.l.b16 %v179
    %v373 = vunpack.c.h.b16 %v179
    %v374 = vunpack.c.l.b16 %v180
    %v375 = vunpack.c.h.b16 %v180
    %v376 = vunpack.c.l.b16 %v181
    %v377 = vunpack.c.h.b16 %v181
    %v378 = vunpack.c.l.b16 %v182
    %v379 = vunpack.c.h.b16 %v182
    %v380 = vunpack.c.l.b16 %v183
    %v381 = vunpack.c.h.b16 %v183
    %v382 = vunpack.c.l.b16 %v184
    %v383 = vunpack.c.h.b16 %v184
    %v384 = vunpack.c.l.b16 %v185
    %v385 = vunpack.c.h.b16 %v185
    %v386 = vunpack.c.l.b16 %v186
    %v387 = vunpack.c.h.b16 %v186
    %v388 = vunpack.c.l.b16 %v187
    %v389 = vunpack.c.h.b16 %v187
    %v390 = vunpack.c.l.b16 %v188
    %v391 = vunpack.c.h.b16 %v188
    %v392 = vunpack.c.l.b16 %v189
    %v393 = vunpack.c.h.b16 %v189
    %v394 = vunpack.c.l.b16 %v190
    %v395 = vunpack.c.h.b16 %v190
    %v396 = vunpack.c.l.b16 %v191
    %v397 = vunpack.c.h.b16 %v191
    %v398 = vunpack.c.l.b16 %v192
    %v399 = vunpack.c.h.b16 %v192
    %v400 = vunpack.c.l.b16 %v193
    %v401 = vunpack.c.h.b16 %v193
    %v402 = vunpack.c.l.b16 %v194
    %v403 = vunpack.c.h.b16 %v194
    %v404 = vunpack.c.l.b16 %v195
    %v405 = vunpack.c.h.b16 %v195
    %v406 = vunpack.c.l.b16 %v196
    %v407 = vunpack.c.h.b16 %v196
    %v408 = vunpack.c.l.b16 %v197
    %v409 = vunpack.c.h.b16 %v197
    %v410 = vunpack.c.l.b16 %v198
    %v411 = vunpack.c.h.b16 %v198
    %v412 = vunpack.c.l.b16 %v199
    %v413 = vunpack.c.h.b16 %v199
    %v414 = vpack.c.b16 %v290, %v286
    %v415 = vpack.c.b16 %v291, %v287
    %v416 = vpack.c.b16 %v292, %v288
    %v417 = vpack.c.b16 %v293, %v289
    %v418 = vpack.c.b16 %v298, %v294
    %v419 = vpack.c.b16 %v299, %v295
    %v420 = vpack.c.b16 %v300, %v296
    %v421 = vpack.c.b16 %v301, %v297
    %v422 = vpack.c.b16 %v306, %v302
    %v423 = vpack.c.b16 %v307, %v303
    %v424 = vpack.c.b16 %v308, %v304
    %v425 = vpack.c.b16 %v309, %v305
    %v426 = vpack.c.b16 %v314, %v310
    %v427 = vpack.c.b16 %v315, %v311
    %v428 = vpack.c.b16 %v316, %v312
    %v429 = vpack.c.b16 %v317, %v313
    %v430 = vpack.c.b16 %v322, %v318
    %v431 = vpack.c.b16 %v323, %v319
    %v432 = vpack.c.b16 %v324, %v320
    %v433 = vpack.c.b16 %v325, %v321
    %v434 = vpack.c.b16 %v330, %v326
    %v435 = vpack.c.b16 %v331, %v327
    %v436 = vpack.c.b16 %v332, %v328
    %v437 = vpack.c.b16 %v333, %v329
    %v438 = vpack.c.b16 %v338, %v334
    %v439 = vpack.c.b16 %v339, %v335
    %v440 = vpack.c.b16 %v340, %v336
    %v441 = vpack.c.b16 %v341, %v337
    %v442 = vpack.c.b16 %v346, %v342
    %v443 = vpack.c.b16 %v347, %v343
    %v444 = vpack.c.b16 %v348, %v344
    %v445 = vpack.c.b16 %v349, %v345
    %v446 = vpack.c.b16 %v354, %v350
    %v447 = vpack.c.b16 %v355, %v351
    %v448 = vpack.c.b16 %v356, %v352
    %v449 = vpack.c.b16 %v357, %v353
    %v450 = vpack.c.b16 %v362, %v358
    %v451 = vpack.c.b16 %v363, %v359
    %v452 = vpack.c.b16 %v364, %v360
    %v453 = vpack.c.b16 %v365, %v361
    %v454 = vpack.c.b16 %v370, %v366
    %v455 = vpack.c.b16 %v371, %v367
    %v456 = vpack.c.b16 %v372, %v368
    %v457 = vpack.c.b16 %v373, %v369
    %v458 = vpack.c.b16 %v378, %v374
    %v459 = vpack.c.b16 %v379, %v375
    %v460 = vpack.c.b16 %v380, %v376
    %v461 = vpack.c.b16 %v381, %v377
    %v462 = vpack.c.b16 %v386, %v382
    %v463 = vpack.c.b16 %v387, %v383
    %v464 = vpack.c.b16 %v388, %v384
    %v465 = vpack.c.b16 %v389, %v385
    %v466 = vpack.c.b16 %v394, %v390
    %v467 = vpack.c.b16 %v395, %v391
    %v468 = vpack.c.b16 %v396, %v392
    %v469 = vpack.c.b16 %v397, %v393
    %v470 = vpack.c.b16 %v402, %v398
    %v471 = vpack.c.b16 %v403, %v399
    %v472 = vpack.c.b16 %v404, %v400
    %v473 = vpack.c.b16 %v405, %v401
    %v474 = vpack.c.b16 %v410, %v406
    %v475 = vpack.c.b16 %v411, %v407
    %v476 = vpack.c.b16 %v412, %v408
    %v477 = vpack.c.b16 %v413, %v409
    %542 = vmatprep.subr.bf16.mxu0 %v415
    %543 = vmatpush1.bf16.msra.mxu0 %v414
    %544 = vmatprep.subr.bf16.mxu0 %v419
    %545 = vmatpush1.bf16.msra.mxu0 %v418
    %546 = vmatprep.subr.bf16.mxu0 %v423
    %547 = vmatpush1.bf16.msra.mxu0 %v422
    %548 = vmatprep.subr.bf16.mxu0 %v427
    %549 = vmatpush1.bf16.msra.mxu0 %v426
    %550 = vmatprep.subr.bf16.mxu0 %v431
    %551 = vmatpush1.bf16.msra.mxu0 %v430
    %552 = vmatprep.subr.bf16.mxu0 %v435
    %553 = vmatpush1.bf16.msra.mxu0 %v434
    %554 = vmatprep.subr.bf16.mxu0 %v439
    %555 = vmatpush1.bf16.msra.mxu0 %v438
    %556 = vmatprep.subr.bf16.mxu0 %v443
    %557 = vmatpush1.bf16.msra.mxu0 %v442
    %558 = vmatprep.subr.bf16.mxu0 %v447
    %559 = vmatpush1.bf16.msra.mxu0 %v446
    %560 = vmatprep.subr.bf16.mxu0 %v451
    %561 = vmatpush1.bf16.msra.mxu0 %v450
    %562 = vmatprep.subr.bf16.mxu0 %v455
    %563 = vmatpush1.bf16.msra.mxu0 %v454
    %564 = vmatprep.subr.bf16.mxu0 %v459
    %565 = vmatpush1.bf16.msra.mxu0 %v458
    %566 = vmatprep.subr.bf16.mxu0 %v463
    %567 = vmatpush1.bf16.msra.mxu0 %v462
    %568 = vmatprep.subr.bf16.mxu0 %v467
    %569 = vmatpush1.bf16.msra.mxu0 %v466
    %570 = vmatprep.subr.bf16.mxu0 %v471
    %571 = vmatpush1.bf16.msra.mxu0 %v470
    %572 = vmatprep.subr.bf16.mxu0 %v475
    %573 = vmatpush1.bf16.msra.mxu0 %v474
    %574 = vmatprep.mubr.bf16.mxu0 %v135
    %575 = vmatmul.mubr.bf16.gmra.mrb[0].mxu0 %v134
    %v576 = vpop.f32.mrb[0].mxu0
    %v577 = vadd.f32 %v205, %v576
    %v578 = vpop.f32.mrb[0].mxu0
    %v579 = vadd.f32 %v209, %v578
    %v580 = vpop.f32.mrb[0].mxu0
    %v581 = vpop.f32.mrb[0].mxu0
    %582 = vdwg.mxu0
    %583 = vmatprep.subr.bf16.mxu0 %v417
    %584 = vmatpush1.bf16.msra.mxu0 %v416
    %585 = vmatprep.subr.bf16.mxu0 %v421
    %586 = vmatpush1.bf16.msra.mxu0 %v420
    %587 = vmatprep.subr.bf16.mxu0 %v425
    %588 = vmatpush1.bf16.msra.mxu0 %v424
    %589 = vmatprep.subr.bf16.mxu0 %v429
    %590 = vmatpush1.bf16.msra.mxu0 %v428
    %591 = vmatprep.subr.bf16.mxu0 %v433
    %592 = vmatpush1.bf16.msra.mxu0 %v432
    %593 = vmatprep.subr.bf16.mxu0 %v437
    %594 = vmatpush1.bf16.msra.mxu0 %v436
    %595 = vmatprep.subr.bf16.mxu0 %v441
    %596 = vmatpush1.bf16.msra.mxu0 %v440
    %597 = vmatprep.subr.bf16.mxu0 %v445
    %598 = vmatpush1.bf16.msra.mxu0 %v444
    %599 = vmatprep.subr.bf16.mxu0 %v449
    %600 = vmatpush1.bf16.msra.mxu0 %v448
    %601 = vmatprep.subr.bf16.mxu0 %v453
    %602 = vmatpush1.bf16.msra.mxu0 %v452
    %603 = vmatprep.subr.bf16.mxu0 %v457
    %604 = vmatpush1.bf16.msra.mxu0 %v456
    %605 = vmatprep.subr.bf16.mxu0 %v461
    %606 = vmatpush1.bf16.msra.mxu0 %v460
    %607 = vmatprep.subr.bf16.mxu0 %v465
    %608 = vmatpush1.bf16.msra.mxu0 %v464
    %609 = vmatprep.subr.bf16.mxu0 %v469
    %610 = vmatpush1.bf16.msra.mxu0 %v468
    %611 = vmatprep.subr.bf16.mxu0 %v473
    %612 = vmatpush1.bf16.msra.mxu0 %v472
    %613 = vmatprep.subr.bf16.mxu0 %v477
    %614 = vmatpush1.bf16.msra.mxu0 %v476
    %615 = vmatprep.mubr.bf16.mxu0 %v135
    %616 = vmatmul.mubr.bf16.gmra.mrb[0].mxu0 %v134
    %v617 = vpop.f32.mrb[0].mxu0
    %v618 = vadd.f32 %v213, %v617
    %v619 = vpop.f32.mrb[0].mxu0
    %v620 = vadd.f32 %v217, %v619
    %v621 = vpop.f32.mrb[0].mxu0
    %v622 = vpop.f32.mrb[0].mxu0
    %623 = vdwg.mxu0
    %v624 = vmax.f32 %v577, 0.0
    %v625 = vmax.f32 %v579, 0.0
    %v626 = vmax.f32 %v618, 0.0
    %v627 = vmax.f32 %v620, 0.0
    %v628 = vpack.c.bf16 %v624, %v624
    %v629 = vpack.c.bf16 %v625, %v625
    %v630 = vpack.c.bf16 %v626, %v626
    %v631 = vpack.c.bf16 %v627, %v627
    %v632 = vld [vmem:[#allocation2] sm:$0xff]
    %v633 = vld [vmem:[#allocation2 + $0x8] sm:$0xff]
    %v634 = vld [vmem:[#allocation2 + $0x10] sm:$0xff]
    %v635 = vld [vmem:[#allocation2 + $0x18] sm:$0xff]
    %v636 = vld [vmem:[#allocation2 + $0x20] sm:$0xff]
    %v637 = vld [vmem:[#allocation2 + $0x28] sm:$0xff]
    %v638 = vld [vmem:[#allocation2 + $0x30] sm:$0xff]
    %v639 = vld [vmem:[#allocation2 + $0x38] sm:$0xff]
    %v640 = vld [vmem:[#allocation2 + $0x40] sm:$0xff]
    %v641 = vld [vmem:[#allocation2 + $0x48] sm:$0xff]
    %v642 = vld [vmem:[#allocation2 + $0x50] sm:$0xff]
    %v643 = vld [vmem:[#allocation2 + $0x58] sm:$0xff]
    %v644 = vld [vmem:[#allocation2 + $0x60] sm:$0xff]
    %v645 = vld [vmem:[#allocation2 + $0x68] sm:$0xff]
    %v646 = vld [vmem:[#allocation2 + $0x70] sm:$0xff]
    %v647 = vld [vmem:[#allocation2 + $0x78] sm:$0xff]
    %v648 = vld [vmem:[#allocation2 + $0x80] sm:$0xff]
    %v649 = vld [vmem:[#allocation2 + $0x88] sm:$0xff]
    %v650 = vld [vmem:[#allocation2 + $0x90] sm:$0xff]
    %v651 = vld [vmem:[#allocation2 + $0x98] sm:$0xff]
    %v652 = vld [vmem:[#allocation2 + $0xa0] sm:$0xff]
    %v653 = vld [vmem:[#allocation2 + $0xa8] sm:$0xff]
    %v654 = vld [vmem:[#allocation2 + $0xb0] sm:$0xff]
    %v655 = vld [vmem:[#allocation2 + $0xb8] sm:$0xff]
    %v656 = vld [vmem:[#allocation2 + $0xc0] sm:$0xff]
    %v657 = vld [vmem:[#allocation2 + $0xc8] sm:$0xff]
    %v658 = vld [vmem:[#allocation2 + $0xd0] sm:$0xff]
    %v659 = vld [vmem:[#allocation2 + $0xd8] sm:$0xff]
    %v660 = vld [vmem:[#allocation2 + $0xe0] sm:$0xff]
    %v661 = vld [vmem:[#allocation2 + $0xe8] sm:$0xff]
    %v662 = vld [vmem:[#allocation2 + $0xf0] sm:$0xff]
    %v663 = vld [vmem:[#allocation2 + $0xf8] sm:$0xff]
    %v664 = vld [vmem:[#allocation2 + $0x100] sm:$0xff]
    %v665 = vld [vmem:[#allocation2 + $0x108] sm:$0xff]
    %v666 = vld [vmem:[#allocation2 + $0x110] sm:$0xff]
    %v667 = vld [vmem:[#allocation2 + $0x118] sm:$0xff]
    %v668 = vld [vmem:[#allocation2 + $0x120] sm:$0xff]
    %v669 = vld [vmem:[#allocation2 + $0x128] sm:$0xff]
    %v670 = vld [vmem:[#allocation2 + $0x130] sm:$0xff]
    %v671 = vld [vmem:[#allocation2 + $0x138] sm:$0xff]
    %v672 = vld [vmem:[#allocation2 + $0x140] sm:$0xff]
    %v673 = vld [vmem:[#allocation2 + $0x148] sm:$0xff]
    %v674 = vld [vmem:[#allocation2 + $0x150] sm:$0xff]
    %v675 = vld [vmem:[#allocation2 + $0x158] sm:$0xff]
    %v676 = vld [vmem:[#allocation2 + $0x160] sm:$0xff]
    %v677 = vld [vmem:[#allocation2 + $0x168] sm:$0xff]
    %v678 = vld [vmem:[#allocation2 + $0x170] sm:$0xff]
    %v679 = vld [vmem:[#allocation2 + $0x178] sm:$0xff]
    %v680 = vld [vmem:[#allocation2 + $0x180] sm:$0xff]
    %v681 = vld [vmem:[#allocation2 + $0x188] sm:$0xff]
    %v682 = vld [vmem:[#allocation2 + $0x190] sm:$0xff]
    %v683 = vld [vmem:[#allocation2 + $0x198] sm:$0xff]
    %v684 = vld [vmem:[#allocation2 + $0x1a0] sm:$0xff]
    %v685 = vld [vmem:[#allocation2 + $0x1a8] sm:$0xff]
    %v686 = vld [vmem:[#allocation2 + $0x1b0] sm:$0xff]
    %v687 = vld [vmem:[#allocation2 + $0x1b8] sm:$0xff]
    %v688 = vld [vmem:[#allocation2 + $0x1c0] sm:$0xff]
    %v689 = vld [vmem:[#allocation2 + $0x1c8] sm:$0xff]
    %v690 = vld [vmem:[#allocation2 + $0x1d0] sm:$0xff]
    %v691 = vld [vmem:[#allocation2 + $0x1d8] sm:$0xff]
    %v692 = vld [vmem:[#allocation2 + $0x1e0] sm:$0xff]
    %v693 = vld [vmem:[#allocation2 + $0x1e8] sm:$0xff]
    %v694 = vld [vmem:[#allocation2 + $0x1f0] sm:$0xff]
    %v695 = vld [vmem:[#allocation2 + $0x1f8] sm:$0xff]
    %v696 = vld [vmem:[%s4 + $0x6] sm:$0x3]
    %v698 = vlaneseq
    %v699 = vshrl.u32 %v698, 7
    %v700 = vsub.s32 0, %v699
    %v701 = vrot.slane %v696, %v700
    %v702 = vlaneseq
    %v703 = vshrl.u32 %v702, 7
    %v704 = vsub.s32 1, %v703
    %v705 = vrot.slane %v696, %v704
    %v772 = vunpack.c.l.b16 %v632
    %v773 = vunpack.c.h.b16 %v632
    %v774 = vunpack.c.l.b16 %v633
    %v775 = vunpack.c.h.b16 %v633
    %v776 = vunpack.c.l.b16 %v634
    %v777 = vunpack.c.h.b16 %v634
    %v778 = vunpack.c.l.b16 %v635
    %v779 = vunpack.c.h.b16 %v635
    %v780 = vunpack.c.l.b16 %v636
    %v781 = vunpack.c.h.b16 %v636
    %v782 = vunpack.c.l.b16 %v637
    %v783 = vunpack.c.h.b16 %v637
    %v784 = vunpack.c.l.b16 %v638
    %v785 = vunpack.c.h.b16 %v638
    %v786 = vunpack.c.l.b16 %v639
    %v787 = vunpack.c.h.b16 %v639
    %v788 = vunpack.c.l.b16 %v640
    %v789 = vunpack.c.h.b16 %v640
    %v790 = vunpack.c.l.b16 %v641
    %v791 = vunpack.c.h.b16 %v641
    %v792 = vunpack.c.l.b16 %v642
    %v793 = vunpack.c.h.b16 %v642
    %v794 = vunpack.c.l.b16 %v643
    %v795 = vunpack.c.h.b16 %v643
    %v796 = vunpack.c.l.b16 %v644
    %v797 = vunpack.c.h.b16 %v644
    %v798 = vunpack.c.l.b16 %v645
    %v799 = vunpack.c.h.b16 %v645
    %v800 = vunpack.c.l.b16 %v646
    %v801 = vunpack.c.h.b16 %v646
    %v802 = vunpack.c.l.b16 %v647
    %v803 = vunpack.c.h.b16 %v647
    %v804 = vunpack.c.l.b16 %v648
    %v805 = vunpack.c.h.b16 %v648
    %v806 = vunpack.c.l.b16 %v649
    %v807 = vunpack.c.h.b16 %v649
    %v808 = vunpack.c.l.b16 %v650
    %v809 = vunpack.c.h.b16 %v650
    %v810 = vunpack.c.l.b16 %v651
    %v811 = vunpack.c.h.b16 %v651
    %v812 = vunpack.c.l.b16 %v652
    %v813 = vunpack.c.h.b16 %v652
    %v814 = vunpack.c.l.b16 %v653
    %v815 = vunpack.c.h.b16 %v653
    %v816 = vunpack.c.l.b16 %v654
    %v817 = vunpack.c.h.b16 %v654
    %v818 = vunpack.c.l.b16 %v655
    %v819 = vunpack.c.h.b16 %v655
    %v820 = vunpack.c.l.b16 %v656
    %v821 = vunpack.c.h.b16 %v656
    %v822 = vunpack.c.l.b16 %v657
    %v823 = vunpack.c.h.b16 %v657
    %v824 = vunpack.c.l.b16 %v658
    %v825 = vunpack.c.h.b16 %v658
    %v826 = vunpack.c.l.b16 %v659
    %v827 = vunpack.c.h.b16 %v659
    %v828 = vunpack.c.l.b16 %v660
    %v829 = vunpack.c.h.b16 %v660
    %v830 = vunpack.c.l.b16 %v661
    %v831 = vunpack.c.h.b16 %v661
    %v832 = vunpack.c.l.b16 %v662
    %v833 = vunpack.c.h.b16 %v662
    %v834 = vunpack.c.l.b16 %v663
    %v835 = vunpack.c.h.b16 %v663
    %v836 = vunpack.c.l.b16 %v664
    %v837 = vunpack.c.h.b16 %v664
    %v838 = vunpack.c.l.b16 %v665
    %v839 = vunpack.c.h.b16 %v665
    %v840 = vunpack.c.l.b16 %v666
    %v841 = vunpack.c.h.b16 %v666
    %v842 = vunpack.c.l.b16 %v667
    %v843 = vunpack.c.h.b16 %v667
    %v844 = vunpack.c.l.b16 %v668
    %v845 = vunpack.c.h.b16 %v668
    %v846 = vunpack.c.l.b16 %v669
    %v847 = vunpack.c.h.b16 %v669
    %v848 = vunpack.c.l.b16 %v670
    %v849 = vunpack.c.h.b16 %v670
    %v850 = vunpack.c.l.b16 %v671
    %v851 = vunpack.c.h.b16 %v671
    %v852 = vunpack.c.l.b16 %v672
    %v853 = vunpack.c.h.b16 %v672
    %v854 = vunpack.c.l.b16 %v673
    %v855 = vunpack.c.h.b16 %v673
    %v856 = vunpack.c.l.b16 %v674
    %v857 = vunpack.c.h.b16 %v674
    %v858 = vunpack.c.l.b16 %v675
    %v859 = vunpack.c.h.b16 %v675
    %v860 = vunpack.c.l.b16 %v676
    %v861 = vunpack.c.h.b16 %v676
    %v862 = vunpack.c.l.b16 %v677
    %v863 = vunpack.c.h.b16 %v677
    %v864 = vunpack.c.l.b16 %v678
    %v865 = vunpack.c.h.b16 %v678
    %v866 = vunpack.c.l.b16 %v679
    %v867 = vunpack.c.h.b16 %v679
    %v868 = vunpack.c.l.b16 %v680
    %v869 = vunpack.c.h.b16 %v680
    %v870 = vunpack.c.l.b16 %v681
    %v871 = vunpack.c.h.b16 %v681
    %v872 = vunpack.c.l.b16 %v682
    %v873 = vunpack.c.h.b16 %v682
    %v874 = vunpack.c.l.b16 %v683
    %v875 = vunpack.c.h.b16 %v683
    %v876 = vunpack.c.l.b16 %v684
    %v877 = vunpack.c.h.b16 %v684
    %v878 = vunpack.c.l.b16 %v685
    %v879 = vunpack.c.h.b16 %v685
    %v880 = vunpack.c.l.b16 %v686
    %v881 = vunpack.c.h.b16 %v686
    %v882 = vunpack.c.l.b16 %v687
    %v883 = vunpack.c.h.b16 %v687
    %v884 = vunpack.c.l.b16 %v688
    %v885 = vunpack.c.h.b16 %v688
    %v886 = vunpack.c.l.b16 %v689
    %v887 = vunpack.c.h.b16 %v689
    %v888 = vunpack.c.l.b16 %v690
    %v889 = vunpack.c.h.b16 %v690
    %v890 = vunpack.c.l.b16 %v691
    %v891 = vunpack.c.h.b16 %v691
    %v892 = vunpack.c.l.b16 %v692
    %v893 = vunpack.c.h.b16 %v692
    %v894 = vunpack.c.l.b16 %v693
    %v895 = vunpack.c.h.b16 %v693
    %v896 = vunpack.c.l.b16 %v694
    %v897 = vunpack.c.h.b16 %v694
    %v898 = vunpack.c.l.b16 %v695
    %v899 = vunpack.c.h.b16 %v695
    %v900 = vpack.c.b16 %v774, %v772
    %v901 = vpack.c.b16 %v775, %v773
    %v902 = vpack.c.b16 %v778, %v776
    %v903 = vpack.c.b16 %v779, %v777
    %v904 = vpack.c.b16 %v782, %v780
    %v905 = vpack.c.b16 %v783, %v781
    %v906 = vpack.c.b16 %v786, %v784
    %v907 = vpack.c.b16 %v787, %v785
    %v908 = vpack.c.b16 %v790, %v788
    %v909 = vpack.c.b16 %v791, %v789
    %v910 = vpack.c.b16 %v794, %v792
    %v911 = vpack.c.b16 %v795, %v793
    %v912 = vpack.c.b16 %v798, %v796
    %v913 = vpack.c.b16 %v799, %v797
    %v914 = vpack.c.b16 %v802, %v800
    %v915 = vpack.c.b16 %v803, %v801
    %v916 = vpack.c.b16 %v806, %v804
    %v917 = vpack.c.b16 %v807, %v805
    %v918 = vpack.c.b16 %v810, %v808
    %v919 = vpack.c.b16 %v811, %v809
    %v920 = vpack.c.b16 %v814, %v812
    %v921 = vpack.c.b16 %v815, %v813
    %v922 = vpack.c.b16 %v818, %v816
    %v923 = vpack.c.b16 %v819, %v817
    %v924 = vpack.c.b16 %v822, %v820
    %v925 = vpack.c.b16 %v823, %v821
    %v926 = vpack.c.b16 %v826, %v824
    %v927 = vpack.c.b16 %v827, %v825
    %v928 = vpack.c.b16 %v830, %v828
    %v929 = vpack.c.b16 %v831, %v829
    %v930 = vpack.c.b16 %v834, %v832
    %v931 = vpack.c.b16 %v835, %v833
    %v932 = vpack.c.b16 %v838, %v836
    %v933 = vpack.c.b16 %v839, %v837
    %v934 = vpack.c.b16 %v842, %v840
    %v935 = vpack.c.b16 %v843, %v841
    %v936 = vpack.c.b16 %v846, %v844
    %v937 = vpack.c.b16 %v847, %v845
    %v938 = vpack.c.b16 %v850, %v848
    %v939 = vpack.c.b16 %v851, %v849
    %v940 = vpack.c.b16 %v854, %v852
    %v941 = vpack.c.b16 %v855, %v853
    %v942 = vpack.c.b16 %v858, %v856
    %v943 = vpack.c.b16 %v859, %v857
    %v944 = vpack.c.b16 %v862, %v860
    %v945 = vpack.c.b16 %v863, %v861
    %v946 = vpack.c.b16 %v866, %v864
    %v947 = vpack.c.b16 %v867, %v865
    %v948 = vpack.c.b16 %v870, %v868
    %v949 = vpack.c.b16 %v871, %v869
    %v950 = vpack.c.b16 %v874, %v872
    %v951 = vpack.c.b16 %v875, %v873
    %v952 = vpack.c.b16 %v878, %v876
    %v953 = vpack.c.b16 %v879, %v877
    %v954 = vpack.c.b16 %v882, %v880
    %v955 = vpack.c.b16 %v883, %v881
    %v956 = vpack.c.b16 %v886, %v884
    %v957 = vpack.c.b16 %v887, %v885
    %v958 = vpack.c.b16 %v890, %v888
    %v959 = vpack.c.b16 %v891, %v889
    %v960 = vpack.c.b16 %v894, %v892
    %v961 = vpack.c.b16 %v895, %v893
    %v962 = vpack.c.b16 %v898, %v896
    %v963 = vpack.c.b16 %v899, %v897
    %1028 = vmatprep.subr.bf16.mxu0 %v901
    %1029 = vmatpush1.bf16.msra.mxu0 %v900
    %1030 = vmatprep.subr.bf16.mxu0 %v903
    %1031 = vmatpush1.bf16.msra.mxu0 %v902
    %1032 = vmatprep.subr.bf16.mxu0 %v905
    %1033 = vmatpush1.bf16.msra.mxu0 %v904
    %1034 = vmatprep.subr.bf16.mxu0 %v907
    %1035 = vmatpush1.bf16.msra.mxu0 %v906
    %1036 = vmatprep.subr.bf16.mxu0 %v909
    %1037 = vmatpush1.bf16.msra.mxu0 %v908
    %1038 = vmatprep.subr.bf16.mxu0 %v911
    %1039 = vmatpush1.bf16.msra.mxu0 %v910
    %1040 = vmatprep.subr.bf16.mxu0 %v913
    %1041 = vmatpush1.bf16.msra.mxu0 %v912
    %1042 = vmatprep.subr.bf16.mxu0 %v915
    %1043 = vmatpush1.bf16.msra.mxu0 %v914
    %1044 = vmatprep.subr.bf16.mxu0 %v917
    %1045 = vmatpush1.bf16.msra.mxu0 %v916
    %1046 = vmatprep.subr.bf16.mxu0 %v919
    %1047 = vmatpush1.bf16.msra.mxu0 %v918
    %1048 = vmatprep.subr.bf16.mxu0 %v921
    %1049 = vmatpush1.bf16.msra.mxu0 %v920
    %1050 = vmatprep.subr.bf16.mxu0 %v923
    %1051 = vmatpush1.bf16.msra.mxu0 %v922
    %1052 = vmatprep.subr.bf16.mxu0 %v925
    %1053 = vmatpush1.bf16.msra.mxu0 %v924
    %1054 = vmatprep.subr.bf16.mxu0 %v927
    %1055 = vmatpush1.bf16.msra.mxu0 %v926
    %1056 = vmatprep.subr.bf16.mxu0 %v929
    %1057 = vmatpush1.bf16.msra.mxu0 %v928
    %1058 = vmatprep.subr.bf16.mxu0 %v931
    %1059 = vmatpush1.bf16.msra.mxu0 %v930
    %1060 = vmatprep.mubr.bf16.mxu0 %v629
    %1061 = vmatmul.mubr.bf16.gmra.mrb[0].mxu0 %v628
    %v1062 = vpop.f32.mrb[0].mxu0
    %v1063 = vadd.f32 %v701, %v1062
    %v1064 = vpop.f32.mrb[0].mxu0
    %v1065 = vadd.f32 %v705, %v1064
    %v1066 = vpop.f32.mrb[0].mxu0
    %v1067 = vpop.f32.mrb[0].mxu0
    %1068 = vdwg.mxu0
    %1069 = vmatprep.subr.bf16.mxu0 %v933
    %1070 = vmatpush1.bf16.msra.mxu0 %v932
    %1071 = vmatprep.subr.bf16.mxu0 %v935
    %1072 = vmatpush1.bf16.msra.mxu0 %v934
    %1073 = vmatprep.subr.bf16.mxu0 %v937
    %1074 = vmatpush1.bf16.msra.mxu0 %v936
    %1075 = vmatprep.subr.bf16.mxu0 %v939
    %1076 = vmatpush1.bf16.msra.mxu0 %v938
    %1077 = vmatprep.subr.bf16.mxu0 %v941
    %1078 = vmatpush1.bf16.msra.mxu0 %v940
    %1079 = vmatprep.subr.bf16.mxu0 %v943
    %1080 = vmatpush1.bf16.msra.mxu0 %v942
    %1081 = vmatprep.subr.bf16.mxu0 %v945
    %1082 = vmatpush1.bf16.msra.mxu0 %v944
    %1083 = vmatprep.subr.bf16.mxu0 %v947
    %1084 = vmatpush1.bf16.msra.mxu0 %v946
    %1085 = vmatprep.subr.bf16.mxu0 %v949
    %1086 = vmatpush1.bf16.msra.mxu0 %v948
    %1087 = vmatprep.subr.bf16.mxu0 %v951
    %1088 = vmatpush1.bf16.msra.mxu0 %v950
    %1089 = vmatprep.subr.bf16.mxu0 %v953
    %1090 = vmatpush1.bf16.msra.mxu0 %v952
    %1091 = vmatprep.subr.bf16.mxu0 %v955
    %1092 = vmatpush1.bf16.msra.mxu0 %v954
    %1093 = vmatprep.subr.bf16.mxu0 %v957
    %1094 = vmatpush1.bf16.msra.mxu0 %v956
    %1095 = vmatprep.subr.bf16.mxu0 %v959
    %1096 = vmatpush1.bf16.msra.mxu0 %v958
    %1097 = vmatprep.subr.bf16.mxu0 %v961
    %1098 = vmatpush1.bf16.msra.mxu0 %v960
    %1099 = vmatprep.subr.bf16.mxu0 %v963
    %1100 = vmatpush1.bf16.msra.mxu0 %v962
    %1101 = vmatprep.mubr.bf16.mxu0 %v631
    %1102 = vmatmul.mubr.bf16.gmra.mrb[0].mxu0 %v630
    %v1103 = vpop.f32.mrb[0].mxu0
    %v1104 = vadd.f32 %v1063, %v1103
    %v1105 = vpop.f32.mrb[0].mxu0
    %v1106 = vadd.f32 %v1065, %v1105
    %v1107 = vpop.f32.mrb[0].mxu0
    %v1108 = vpop.f32.mrb[0].mxu0
    %1109 = vdwg.mxu0
    %v1110 = vmax.f32 %v1104, 0.0
    %v1111 = vmax.f32 %v1106, 0.0
    %v1112 = vpack.c.bf16 %v1110, %v1110
    %v1113 = vpack.c.bf16 %v1111, %v1111
    %v1114 = vld [vmem:[#allocation4 + $0x10] sm:$0xf]
    %v1115 = vld [vmem:[#allocation4 + $0x24] sm:$0xf]
    %v1116 = vld [vmem:[#allocation4 + $0x38] sm:$0xf]
    %v1117 = vld [vmem:[#allocation4 + $0x4c] sm:$0xf]
    %v1118 = vld [vmem:[#allocation4 + $0x60] sm:$0xf]
    %v1119 = vld [vmem:[#allocation4 + $0x74] sm:$0xf]
    %v1120 = vld [vmem:[#allocation4 + $0x88] sm:$0xf]
    %v1121 = vld [vmem:[#allocation4 + $0x9c] sm:$0xf]
    %v1122 = vld [vmem:[#allocation4 + $0xb0] sm:$0xf]
    %v1123 = vld [vmem:[#allocation4 + $0xc4] sm:$0xf]
    %v1124 = vld [vmem:[#allocation4 + $0xd8] sm:$0xf]
    %v1125 = vld [vmem:[#allocation4 + $0xec] sm:$0xf]
    %v1126 = vld [vmem:[#allocation4 + $0x100] sm:$0xf]
    %v1127 = vld [vmem:[#allocation4 + $0x114] sm:$0xf]
    %v1128 = vld [vmem:[#allocation4 + $0x128] sm:$0xf]
    %v1129 = vld [vmem:[#allocation4 + $0x13c] sm:$0xf]
    %v1130 = vld [vmem:[#allocation4 + $0x150] sm:$0xf]
    %v1131 = vld [vmem:[#allocation4 + $0x164] sm:$0xf]
    %v1132 = vld [vmem:[#allocation4 + $0x178] sm:$0xf]
    %v1133 = vld [vmem:[#allocation4 + $0x18c] sm:$0xf]
    %v1134 = vld [vmem:[#allocation4 + $0x1a0] sm:$0xf]
    %v1135 = vld [vmem:[#allocation4 + $0x1b4] sm:$0xf]
    %v1136 = vld [vmem:[#allocation4 + $0x1c8] sm:$0xf]
    %v1137 = vld [vmem:[#allocation4 + $0x1dc] sm:$0xf]
    %v1138 = vld [vmem:[#allocation4 + $0x1f0] sm:$0xf]
    %v1139 = vld [vmem:[#allocation4 + $0x204] sm:$0xf]
    %v1140 = vld [vmem:[#allocation4 + $0x218] sm:$0xf]
    %v1141 = vld [vmem:[#allocation4 + $0x22c] sm:$0xf]
    %v1142 = vld [vmem:[#allocation4 + $0x240] sm:$0xf]
    %v1143 = vld [vmem:[#allocation4 + $0x254] sm:$0xf]
    %v1144 = vld [vmem:[#allocation4 + $0x268] sm:$0xf]
    %v1145 = vld [vmem:[#allocation4 + $0x27c] sm:$0xf]
    %v1146 = vld [vmem:[%s4 + $0x8] sm:$0x1]
    %v1148 = vlaneseq
    %v1149 = vshrl.u32 %v1148, 7
    %v1150 = vsub.s32 0, %v1149
    %v1151 = vrot.slane %v1146, %v1150
    %v1185 = vunpack.c.l.b16 %v1114
    %v1186 = vunpack.c.l.b16 %v1115
    %v1187 = vunpack.c.l.b16 %v1116
    %v1188 = vunpack.c.l.b16 %v1117
    %v1189 = vunpack.c.l.b16 %v1118
    %v1190 = vunpack.c.l.b16 %v1119
    %v1191 = vunpack.c.l.b16 %v1120
    %v1192 = vunpack.c.l.b16 %v1121
    %v1193 = vunpack.c.l.b16 %v1122
    %v1194 = vunpack.c.l.b16 %v1123
    %v1195 = vunpack.c.l.b16 %v1124
    %v1196 = vunpack.c.l.b16 %v1125
    %v1197 = vunpack.c.l.b16 %v1126
    %v1198 = vunpack.c.l.b16 %v1127
    %v1199 = vunpack.c.l.b16 %v1128
    %v1200 = vunpack.c.l.b16 %v1129
    %v1201 = vunpack.c.l.b16 %v1130
    %v1202 = vunpack.c.l.b16 %v1131
    %v1203 = vunpack.c.l.b16 %v1132
    %v1204 = vunpack.c.l.b16 %v1133
    %v1205 = vunpack.c.l.b16 %v1134
    %v1206 = vunpack.c.l.b16 %v1135
    %v1207 = vunpack.c.l.b16 %v1136
    %v1208 = vunpack.c.l.b16 %v1137
    %v1209 = vunpack.c.l.b16 %v1138
    %v1210 = vunpack.c.l.b16 %v1139
    %v1211 = vunpack.c.l.b16 %v1140
    %v1212 = vunpack.c.l.b16 %v1141
    %v1213 = vunpack.c.l.b16 %v1142
    %v1214 = vunpack.c.l.b16 %v1143
    %v1215 = vunpack.c.l.b16 %v1144
    %v1216 = vunpack.c.l.b16 %v1145
    %v1217 = vpack.c.b16 %v1186, %v1185
    %v1218 = vpack.c.b16 %v1188, %v1187
    %v1219 = vpack.c.b16 %v1190, %v1189
    %v1220 = vpack.c.b16 %v1192, %v1191
    %v1221 = vpack.c.b16 %v1194, %v1193
    %v1222 = vpack.c.b16 %v1196, %v1195
    %v1223 = vpack.c.b16 %v1198, %v1197
    %v1224 = vpack.c.b16 %v1200, %v1199
    %v1225 = vpack.c.b16 %v1202, %v1201
    %v1226 = vpack.c.b16 %v1204, %v1203
    %v1227 = vpack.c.b16 %v1206, %v1205
    %v1228 = vpack.c.b16 %v1208, %v1207
    %v1229 = vpack.c.b16 %v1210, %v1209
    %v1230 = vpack.c.b16 %v1212, %v1211
    %v1231 = vpack.c.b16 %v1214, %v1213
    %v1232 = vpack.c.b16 %v1216, %v1215
    %1249 = vmatprep.subr.bf16.mxu0 0
    %1250 = vmatpush1.bf16.msra.mxu0 %v1217
    %1251 = vmatprep.subr.bf16.mxu0 0
    %1252 = vmatpush1.bf16.msra.mxu0 %v1218
    %1253 = vmatprep.subr.bf16.mxu0 0
    %1254 = vmatpush1.bf16.msra.mxu0 %v1219
    %1255 = vmatprep.subr.bf16.mxu0 0
    %1256 = vmatpush1.bf16.msra.mxu0 %v1220
    %1257 = vmatprep.subr.bf16.mxu0 0
    %1258 = vmatpush1.bf16.msra.mxu0 %v1221
    %1259 = vmatprep.subr.bf16.mxu0 0
    %1260 = vmatpush1.bf16.msra.mxu0 %v1222
    %1261 = vmatprep.subr.bf16.mxu0 0
    %1262 = vmatpush1.bf16.msra.mxu0 %v1223
    %1263 = vmatprep.subr.bf16.mxu0 0
    %1264 = vmatpush1.bf16.msra.mxu0 %v1224
    %1265 = vmatprep.subr.bf16.mxu0 0
    %1266 = vmatpush1.bf16.msra.mxu0 %v1225
    %1267 = vmatprep.subr.bf16.mxu0 0
    %1268 = vmatpush1.bf16.msra.mxu0 %v1226
    %1269 = vmatprep.subr.bf16.mxu0 0
    %1270 = vmatpush1.bf16.msra.mxu0 %v1227
    %1271 = vmatprep.subr.bf16.mxu0 0
    %1272 = vmatpush1.bf16.msra.mxu0 %v1228
    %1273 = vmatprep.subr.bf16.mxu0 0
    %1274 = vmatpush1.bf16.msra.mxu0 %v1229
    %1275 = vmatprep.subr.bf16.mxu0 0
    %1276 = vmatpush1.bf16.msra.mxu0 %v1230
    %1277 = vmatprep.subr.bf16.mxu0 0
    %1278 = vmatpush1.bf16.msra.mxu0 %v1231
    %1279 = vmatprep.subr.bf16.mxu0 0
    %1280 = vmatpush1.bf16.msra.mxu0 %v1232
    %1281 = vmatprep.mubr.bf16.mxu0 %v1113
    %1282 = vmatmul.mubr.bf16.gmra.mrb[0].mxu0 %v1112
    %v1283 = vpop.f32.mrb[0].mxu0
    %v1284 = vadd.f32 %v1151, %v1283
    %v1285 = vpop.f32.mrb[0].mxu0
    %v1286 = vpop.f32.mrb[0].mxu0
    %v1287 = vpop.f32.mrb[0].mxu0
    %1288 = vdwg.mxu0
    %v1289 = vmax.f32 %v1284, 0.0
    %v1290 = vpack.c.bf16 %v1289, %v1289
    %v1291 = vld [vmem:[#allocation6 + $0x8] sm:$0xf]
    %v1292 = vld [vmem:[#allocation6 + $0x18] sm:$0xf]
    %v1293 = vld [vmem:[#allocation6 + $0x28] sm:$0xf]
    %v1294 = vld [vmem:[#allocation6 + $0x38] sm:$0xf]
    %v1295 = vld [vmem:[#allocation6 + $0x48] sm:$0xf]
    %v1296 = vld [vmem:[#allocation6 + $0x58] sm:$0xf]
    %v1297 = vld [vmem:[#allocation6 + $0x68] sm:$0xf]
    %v1298 = vld [vmem:[#allocation6 + $0x78] sm:$0xf]
    %v1299 = vld [vmem:[#allocation6 + $0x88] sm:$0xf]
    %v1300 = vld [vmem:[#allocation6 + $0x98] sm:$0xf]
    %v1301 = vld [vmem:[#allocation6 + $0xa8] sm:$0xf]
    %v1302 = vld [vmem:[#allocation6 + $0xb8] sm:$0xf]
    %v1303 = vld [vmem:[#allocation6 + $0xc8] sm:$0xf]
    %v1304 = vld [vmem:[#allocation6 + $0xd8] sm:$0xf]
    %v1305 = vld [vmem:[#allocation6 + $0xe8] sm:$0xf]
    %v1306 = vld [vmem:[#allocation6 + $0xf8] sm:$0xf]
    %v1307 = vld [vmem:[%s4 + $0x9] sm:$0x1]
    %v1309 = vlaneseq
    %v1310 = vshrl.u32 %v1309, 7
    %v1311 = vsub.s32 0, %v1310
    %v1312 = vrot.slane %v1307, %v1311
    %v1330 = vunpack.c.l.b16 %v1291
    %v1331 = vunpack.c.l.b16 %v1292
    %v1332 = vunpack.c.l.b16 %v1293
    %v1333 = vunpack.c.l.b16 %v1294
    %v1334 = vunpack.c.l.b16 %v1295
    %v1335 = vunpack.c.l.b16 %v1296
    %v1336 = vunpack.c.l.b16 %v1297
    %v1337 = vunpack.c.l.b16 %v1298
    %v1338 = vunpack.c.l.b16 %v1299
    %v1339 = vunpack.c.l.b16 %v1300
    %v1340 = vunpack.c.l.b16 %v1301
    %v1341 = vunpack.c.l.b16 %v1302
    %v1342 = vunpack.c.l.b16 %v1303
    %v1343 = vunpack.c.l.b16 %v1304
    %v1344 = vunpack.c.l.b16 %v1305
    %v1345 = vunpack.c.l.b16 %v1306
    %v1346 = vpack.c.b16 %v1331, %v1330
    %v1347 = vpack.c.b16 %v1333, %v1332
    %v1348 = vpack.c.b16 %v1335, %v1334
    %v1349 = vpack.c.b16 %v1337, %v1336
    %v1350 = vpack.c.b16 %v1339, %v1338
    %v1351 = vpack.c.b16 %v1341, %v1340
    %v1352 = vpack.c.b16 %v1343, %v1342
    %v1353 = vpack.c.b16 %v1345, %v1344
    %1362 = vmatprep.subr.bf16.mxu0 0
    %1363 = vmatpush1.bf16.msra.mxu0 %v1346
    %1364 = vmatprep.subr.bf16.mxu0 0
    %1365 = vmatpush1.bf16.msra.mxu0 %v1347
    %1366 = vmatprep.subr.bf16.mxu0 0
    %1367 = vmatpush1.bf16.msra.mxu0 %v1348
    %1368 = vmatprep.subr.bf16.mxu0 0
    %1369 = vmatpush1.bf16.msra.mxu0 %v1349
    %1370 = vmatprep.subr.bf16.mxu0 0
    %1371 = vmatpush1.bf16.msra.mxu0 %v1350
    %1372 = vmatprep.subr.bf16.mxu0 0
    %1373 = vmatpush1.bf16.msra.mxu0 %v1351
    %1374 = vmatprep.subr.bf16.mxu0 0
    %1375 = vmatpush1.bf16.msra.mxu0 %v1352
    %1376 = vmatprep.subr.bf16.mxu0 0
    %1377 = vmatpush1.bf16.msra.mxu0 %v1353
    %1378 = vmatprep.subr.bf16.mxu0 0
    %1379 = vmatpush1.bf16.msra.mxu0 0
    %1380 = vmatprep.subr.bf16.mxu0 0
    %1381 = vmatpush1.bf16.msra.mxu0 0
    %1382 = vmatprep.subr.bf16.mxu0 0
    %1383 = vmatpush1.bf16.msra.mxu0 0
    %1384 = vmatprep.subr.bf16.mxu0 0
    %1385 = vmatpush1.bf16.msra.mxu0 0
    %1386 = vmatprep.subr.bf16.mxu0 0
    %1387 = vmatpush1.bf16.msra.mxu0 0
    %1388 = vmatprep.subr.bf16.mxu0 0
    %1389 = vmatpush1.bf16.msra.mxu0 0
    %1390 = vmatprep.subr.bf16.mxu0 0
    %1391 = vmatpush1.bf16.msra.mxu0 0
    %1392 = vmatprep.subr.bf16.mxu0 0
    %1393 = vmatpush1.bf16.msra.mxu0 0
    %1394 = vmatprep.mubr.bf16.mxu0 0
    %1395 = vmatmul.mubr.bf16.gmra.mrb[0].mxu0 %v1290
    %v1396 = vpop.f32.mrb[0].mxu0
    %v1397 = vadd.f32 %v1312, %v1396
    %v1398 = vpop.f32.mrb[0].mxu0
    %v1399 = vpop.f32.mrb[0].mxu0
    %v1400 = vpop.f32.mrb[0].mxu0
    %1401 = vdwg.mxu0
    %v1402 = vmax.f32 %v1397, 0.0
    %v1403 = vpack.c.bf16 %v1402, %v1402
    %v1404 = vld [vmem:[#allocation6 + $0xc] sm:$0xf]
    %v1405 = vld [vmem:[#allocation6 + $0x1c] sm:$0xf]
    %v1406 = vld [vmem:[#allocation6 + $0x2c] sm:$0xf]
    %v1407 = vld [vmem:[#allocation6 + $0x3c] sm:$0xf]
    %v1408 = vld [vmem:[#allocation6 + $0x4c] sm:$0xf]
    %v1409 = vld [vmem:[#allocation6 + $0x5c] sm:$0xf]
    %v1410 = vld [vmem:[#allocation6 + $0x6c] sm:$0xf]
    %v1411 = vld [vmem:[#allocation6 + $0x7c] sm:$0xf]
    %v1412 = vld [vmem:[#allocation6 + $0x8c] sm:$0xf]
    %v1413 = vld [vmem:[#allocation6 + $0x9c] sm:$0xf]
    %v1414 = vld [vmem:[#allocation6 + $0xac] sm:$0xf]
    %v1415 = vld [vmem:[#allocation6 + $0xbc] sm:$0xf]
    %v1416 = vld [vmem:[#allocation6 + $0xcc] sm:$0xf]
    %v1417 = vld [vmem:[#allocation6 + $0xdc] sm:$0xf]
    %v1418 = vld [vmem:[#allocation6 + $0xec] sm:$0xf]
    %v1419 = vld [vmem:[#allocation6 + $0xfc] sm:$0xf]
    %v1420 = vld [vmem:[%s4 + $0xa] sm:$0x1]
    %v1422 = vlaneseq
    %v1423 = vshrl.u32 %v1422, 7
    %v1424 = vsub.s32 0, %v1423
    %v1425 = vrot.slane %v1420, %v1424
    %v1443 = vunpack.c.l.b16 %v1404
    %v1444 = vunpack.c.l.b16 %v1405
    %v1445 = vunpack.c.l.b16 %v1406
    %v1446 = vunpack.c.l.b16 %v1407
    %v1447 = vunpack.c.l.b16 %v1408
    %v1448 = vunpack.c.l.b16 %v1409
    %v1449 = vunpack.c.l.b16 %v1410
    %v1450 = vunpack.c.l.b16 %v1411
    %v1451 = vunpack.c.l.b16 %v1412
    %v1452 = vunpack.c.l.b16 %v1413
    %v1453 = vunpack.c.l.b16 %v1414
    %v1454 = vunpack.c.l.b16 %v1415
    %v1455 = vunpack.c.l.b16 %v1416
    %v1456 = vunpack.c.l.b16 %v1417
    %v1457 = vunpack.c.l.b16 %v1418
    %v1458 = vunpack.c.l.b16 %v1419
    %v1459 = vpack.c.b16 %v1444, %v1443
    %v1460 = vpack.c.b16 %v1446, %v1445
    %v1461 = vpack.c.b16 %v1448, %v1447
    %v1462 = vpack.c.b16 %v1450, %v1449
    %v1463 = vpack.c.b16 %v1452, %v1451
    %v1464 = vpack.c.b16 %v1454, %v1453
    %v1465 = vpack.c.b16 %v1456, %v1455
    %v1466 = vpack.c.b16 %v1458, %v1457
    %1475 = vmatprep.subr.bf16.mxu0 0
    %1476 = vmatpush1.bf16.msra.mxu0 %v1459
    %1477 = vmatprep.subr.bf16.mxu0 0
    %1478 = vmatpush1.bf16.msra.mxu0 %v1460
    %1479 = vmatprep.subr.bf16.mxu0 0
    %1480 = vmatpush1.bf16.msra.mxu0 %v1461
    %1481 = vmatprep.subr.bf16.mxu0 0
    %1482 = vmatpush1.bf16.msra.mxu0 %v1462
    %1483 = vmatprep.subr.bf16.mxu0 0
    %1484 = vmatpush1.bf16.msra.mxu0 %v1463
    %1485 = vmatprep.subr.bf16.mxu0 0
    %1486 = vmatpush1.bf16.msra.mxu0 %v1464
    %1487 = vmatprep.subr.bf16.mxu0 0
    %1488 = vmatpush1.bf16.msra.mxu0 %v1465
    %1489 = vmatprep.subr.bf16.mxu0 0
    %1490 = vmatpush1.bf16.msra.mxu0 %v1466
    %1491 = vmatprep.subr.bf16.mxu0 0
    %1492 = vmatpush1.bf16.msra.mxu0 0
    %1493 = vmatprep.subr.bf16.mxu0 0
    %1494 = vmatpush1.bf16.msra.mxu0 0
    %1495 = vmatprep.subr.bf16.mxu0 0
    %1496 = vmatpush1.bf16.msra.mxu0 0
    %1497 = vmatprep.subr.bf16.mxu0 0
    %1498 = vmatpush1.bf16.msra.mxu0 0
    %1499 = vmatprep.subr.bf16.mxu0 0
    %1500 = vmatpush1.bf16.msra.mxu0 0
    %1501 = vmatprep.subr.bf16.mxu0 0
    %1502 = vmatpush1.bf16.msra.mxu0 0
    %1503 = vmatprep.subr.bf16.mxu0 0
    %1504 = vmatpush1.bf16.msra.mxu0 0
    %1505 = vmatprep.subr.bf16.mxu0 0
    %1506 = vmatpush1.bf16.msra.mxu0 0
    %1507 = vmatprep.mubr.bf16.mxu0 0
    %1508 = vmatmul.mubr.bf16.gmra.mrb[0].mxu0 %v1403
    %v1509 = vpop.f32.mrb[0].mxu0
    %v1510 = vadd.f32 %v1425, %v1509
    %v1511 = vpop.f32.mrb[0].mxu0
    %v1512 = vpop.f32.mrb[0].mxu0
    %v1513 = vpop.f32.mrb[0].mxu0
    %1514 = vdwg.mxu0
    %1515 = vst [vmem:[%s5] sm:$0xff] %v1510
    // Predicated region
    $region34: #{critic_forward.1} parent=1 // pred_check
      _
    $region35: #{critic_forward.1} parent=1 // pred_check_branch
      %1517 = sbr.rel (0) target = $region37
    $region36: #{critic_forward.1} parent=1 // pred_region
      _
    $region37: #{critic_forward.1} parent=1 // pred_fallthru
      _
    // Predicated region
    $region38: #{critic_forward.1} parent=1 // pred_check
      _
    $region39: #{critic_forward.1} parent=1 // pred_check_branch
      %1519 = sbr.rel (0) target = $region41
    $region40: #{critic_forward.1} parent=1 // pred_region
      _
    $region41: #{critic_forward.1} parent=1 // pred_fallthru
      _
    %1520 = vsyncpa [#allocation3], 1
    %1521 = vsyncpa [#allocation5], 1

</llo_original>
